<compile_context>
chip_gen: v5e
topology: v5e:2x2
jax: 0.10.0
libtpu: 0.0.40
codegen_flags: <defaults>
</compile_context>

<pallas_src>
import math

import jax
import jax.numpy as jnp
from jax.experimental import pallas as pl
from jax.experimental.pallas import tpu as pltpu

_LANE = 128  # TPU vreg lane width


def _round_up(v, m):
    return ((v + m - 1) // m) * m


def _tile_config():
    """Generation-aware (max_tile_lanes, vmem_limit_bytes)."""
    try:
        vmem_bytes = pltpu.get_tpu_info().vmem_capacity_bytes
    except Exception:
        vmem_bytes = 64 << 20  # unknown chip: assume v7x-sized VMEM
    if vmem_bytes >= (100 << 20):
        # v5e / v6e: 128 MiB physical VMEM -> 4 MiB HBM traffic per step.
        return 256 * 1024, 64 << 20
    # v7x: 64 MiB physical VMEM -> 2 MiB per step, ~16 MiB pipeline footprint.
    return 128 * 1024, 40 << 20


def linear_kernel(w_ref, b_ref, xt_ref, o_ref):
    # w_ref: SMEM (1, 3) f32, b_ref: SMEM (1,) f32
    # xt_ref: VMEM (3, TM) f32, o_ref: VMEM (1, TM) f32
    w0 = w_ref[0, 0]
    w1 = w_ref[0, 1]
    w2 = w_ref[0, 2]
    b = b_ref[0]
    acc = (xt_ref[0:1, :] * w0
           + xt_ref[1:2, :] * w1
           + xt_ref[2:3, :] * w2
           + b)
    o_ref[...] = acc.astype(o_ref.dtype)


@jax.jit
def poly_model_forward(x, weight, bias):
    """x: (N, 3) f32, weight: (1, 3) f32, bias: (1,) f32 -> (N, 1) f32."""
    n, k = x.shape
    assert k == 3 and weight.shape == (1, 3) and bias.shape == (1,)

    max_tile, vmem_limit = _tile_config()
    # Keep >=4 grid steps at large N (v7x megacore sharding); floor of one
    # vreg of lanes, always a multiple of 128 for lane-dense stores.
    tm = max(_LANE, _round_up(pl.cdiv(n, 4), _LANE))
    tm = min(tm, max_tile)

    # Feature-major layout (3, N): batch on the 128-lane axis so the output
    # is a lane-dense row.  Done inside this jit so XLA fuses the transpose
    # into the pallas_call input copy (no standalone HBM transpose pass).
    xt = x.T

    out_row = pl.pallas_call(
        linear_kernel,
        out_shape=jax.ShapeDtypeStruct((1, n), x.dtype),
        grid=(pl.cdiv(n, tm),),
        in_specs=[
            pl.BlockSpec(memory_space=pltpu.MemorySpace.SMEM),  # weight (1, 3)
            pl.BlockSpec(memory_space=pltpu.MemorySpace.SMEM),  # bias (1,)
            pl.BlockSpec((3, tm), lambda i: (0, i)),            # x.T batch tile
        ],
        out_specs=pl.BlockSpec((1, tm), lambda i: (0, i)),
        compiler_params=pltpu.CompilerParams(
            dimension_semantics=("parallel",),
            vmem_limit_bytes=vmem_limit,
        ),
    )(weight, bias, xt)

    # PyTorch Linear output layout (N, 1): same flat order, free reshape.
    return out_row.reshape(n, 1)


if __name__ == "__main__":
    key = jax.random.PRNGKey(0)
    k_x, k_w, k_b = jax.random.split(key, 3)

    # Deterministic synthetic inputs matching nn.Linear(3, 1).
    bound = 1.0 / math.sqrt(3.0)  # PyTorch's default uniform init range
    weight = jax.random.uniform(k_w, (1, 3), minval=-bound, maxval=bound,
                                dtype=jnp.float32)
    bias = jax.random.uniform(k_b, (1,), minval=-bound, maxval=bound,
                              dtype=jnp.float32)

    # Main (deployment-sized) check: batch = 8.
    batch = 8
    x = jax.random.normal(k_x, (batch, 3), dtype=jnp.float32)
    out = jax.block_until_ready(poly_model_forward(x, weight, bias))
    ref = x @ weight.T + bias
    assert out.shape == (batch, 1)
    assert jnp.allclose(out, ref, atol=1e-5, rtol=1e-5)

    # Ragged, multi-tile check (exercises the no-pad grid + masked last block).
    batch2 = 300
    x2 = jax.random.normal(k_x, (batch2, 3), dtype=jnp.float32)
    out2 = jax.block_until_ready(poly_model_forward(x2, weight, bias))
    ref2 = x2 @ weight.T + bias
    assert out2.shape == (batch2, 1)
    assert jnp.allclose(out2, ref2, atol=1e-5, rtol=1e-5)

    print("KERNEL_OK")
</pallas_src>

<mosaic_0001>
module attributes {stable_mosaic.version = 11 : i64} {
  func.func @linear_kernel(%arg0: i32, %arg1: memref<1x3xf32, #tpu.memory_space<smem>>, %arg2: memref<1xf32, #tpu.memory_space<smem>>, %arg3: memref<3x128xf32, #tpu.memory_space<vmem>>, %arg4: memref<1x128xf32, #tpu.memory_space<vmem>>) attributes {dimension_semantics = [#tpu.dimension_semantics<parallel>], iteration_bounds = array<i64: 1>, scalar_prefetch = 0 : i64, scratch_operands = 0 : i64, tpu.core_type = #tpu.core_type<tc>, window_params = [{transform_indices = @transform_0, window_bounds = array<i64: 1, 3>}, {transform_indices = @transform_1, window_bounds = array<i64: 1>}, {transform_indices = @transform_2, window_bounds = array<i64: 3, 128>}, {transform_indices = @transform_3, window_bounds = array<i64: 1, 128>}]} {
    %c0 = arith.constant 0 : index
    %c0_0 = arith.constant 0 : index
    %0 = memref.load %arg1[%c0, %c0_0] : memref<1x3xf32, #tpu.memory_space<smem>>
    %c0_1 = arith.constant 0 : index
    %c1 = arith.constant 1 : index
    %1 = memref.load %arg1[%c0_1, %c1] : memref<1x3xf32, #tpu.memory_space<smem>>
    %c0_2 = arith.constant 0 : index
    %c2 = arith.constant 2 : index
    %2 = memref.load %arg1[%c0_2, %c2] : memref<1x3xf32, #tpu.memory_space<smem>>
    %c0_3 = arith.constant 0 : index
    %3 = memref.load %arg2[%c0_3] : memref<1xf32, #tpu.memory_space<smem>>
    %c0_4 = arith.constant 0 : index
    %c0_5 = arith.constant 0 : index
    %4 = vector.load %arg3[%c0_4, %c0_5] : memref<3x128xf32, #tpu.memory_space<vmem>>, vector<1x128xf32>
    %5 = vector.broadcast %0 : f32 to vector<1x128xf32>
    %6 = arith.mulf %4, %5 : vector<1x128xf32>
    %c1_6 = arith.constant 1 : index
    %c0_7 = arith.constant 0 : index
    %7 = vector.load %arg3[%c1_6, %c0_7] : memref<3x128xf32, #tpu.memory_space<vmem>>, vector<1x128xf32>
    %8 = vector.broadcast %1 : f32 to vector<1x128xf32>
    %9 = arith.mulf %7, %8 : vector<1x128xf32>
    %10 = arith.addf %6, %9 : vector<1x128xf32>
    %c2_8 = arith.constant 2 : index
    %c0_9 = arith.constant 0 : index
    %11 = vector.load %arg3[%c2_8, %c0_9] : memref<3x128xf32, #tpu.memory_space<vmem>>, vector<1x128xf32>
    %12 = vector.broadcast %2 : f32 to vector<1x128xf32>
    %13 = arith.mulf %11, %12 : vector<1x128xf32>
    %14 = arith.addf %10, %13 : vector<1x128xf32>
    %15 = vector.broadcast %3 : f32 to vector<1x128xf32>
    %16 = arith.addf %14, %15 : vector<1x128xf32>
    %c0_10 = arith.constant 0 : index
    %c0_11 = arith.constant 0 : index
    %17 = vector.load %arg4[%c0_10, %c0_11] : memref<1x128xf32, #tpu.memory_space<vmem>>, vector<1x128xf32>
    tpu.vector_store %arg4[%c0_10, %c0_11], %16 {strides = array<i32>} : memref<1x128xf32, #tpu.memory_space<vmem>>, vector<1x128xf32>,
    return
  }
  func.func @transform_0(%arg0: i32) -> (i32, i32) {
    %c0_i32 = arith.constant 0 : i32
    %c0_i32_0 = arith.constant 0 : i32
    %c0_i32_1 = arith.constant 0 : i32
    return %c0_i32, %c0_i32_0 : i32, i32
  }
  func.func @transform_1(%arg0: i32) -> i32 {
    %c0_i32 = arith.constant 0 : i32
    %c0_i32_0 = arith.constant 0 : i32
    return %c0_i32 : i32
  }
  func.func @transform_2(%arg0: i32) -> (i32, i32) {
    %c0_i32 = arith.constant 0 : i32
    %c0_i32_0 = arith.constant 0 : i32
    return %c0_i32, %arg0 : i32, i32
  }
  func.func @transform_3(%arg0: i32) -> (i32, i32) {
    %c0_i32 = arith.constant 0 : i32
    %c0_i32_0 = arith.constant 0 : i32
    return %c0_i32, %arg0 : i32, i32
  }
}

</mosaic_0001>

<llo_original>
// kernel: poly_model_forward.1
$region0: #{poly_model_forward.1}
  #allocation0 [shape = 'u32[]', space=smem, size = 0x4, offset = 0x4, fixed_abs, tag = 'smem constant byte address 0x4 - core index']
  #allocation1 [shape = 'u32[72,128]{1,0:T(1,128)}', space=vmem, size = 0x9000, scoped, tag = 'internal scratch']
  #allocation2 [shape = 'f32[1]{0:T(128)S(6)}', space=smem, size = 0x200, scoped, tag = 'scoped memory for poly_model_forward.1']
  %s0 = inlined_call_operand.vmem [shape: f32[1,3], index: 0, kind: input, shape index: {}]
  %s1 = inlined_call_operand.<no memory space> [shape: f32[1], index: 1, kind: input, shape index: {}]
  %s2 = inlined_call_operand.hbm [shape: f32[3,8], index: 2, kind: input, shape index: {}]
  %s3 = inlined_call_operand.hbm [shape: f32[1,8], index: 3, kind: output, shape index: {}]
  %s4 = sld [smem:[#allocation0]]
  $region30: #{poly_model_forward.1} parent=0
    _
  %s6 = ssub.s32 1, %s4
  %s7 = scalar_select 0, %s6, %s4
  %8 = sst [smem:[#allocation2]] %s1
  $region1: #{poly_model_forward.1} parent=0
    #allocation3 [shape = 'u8[512]{0}', space=smem, size = 0x200, scoped, tag = 'input window, operand 0, single buffered']
    #allocation4 [shape = 's32[1]{0}', space=sflag, size = 0x4, scoped, tag = 'scoped memory for poly_model_forward.1']
    #allocation5 [shape = 's32[1]{0}', space=sflag, size = 0x4, scoped, tag = 'scoped memory for poly_model_forward.1']
    #allocation6 [shape = 's32[1]{0}', space=sflag, size = 0x4, scoped, tag = 'scoped memory for poly_model_forward.1']
    #allocation7 [shape = 'u8[2048]{0}', space=vmem, size = 0x800, scoped, tag = 'input window, operand 2, single buffered']
    #allocation8 [shape = 'u8[512]{0}', space=vmem, size = 0x400, scoped, tag = 'output window, operand 0, single buffered']
    %9 = vsyncpa [#allocation6], 0
    %10 = vsyncpa [#allocation4], 0
    %11 = vsyncpa [#allocation5], 0
    // Predicated region
    $region2: #{poly_model_forward.1} parent=1 // pred_check
      _
    $region3: #{poly_model_forward.1} parent=1 // pred_check_branch
      %13 = sbr.rel (0) target = $region5
    $region4: #{poly_model_forward.1} parent=1 // pred_region
      %15 = vsyncadd [#allocation6], 0
      %s17 = sshll.u32 %s0, 4
      %s18 = int_to_ptr.vmem [resolvable:$true] %s17
      %20 = dma.vmem_to_smem %s18, 16, [#allocation3], [#allocation6]
    $region5: #{poly_model_forward.1} parent=1 // pred_fallthru
      _
    // Predicated region
    $region6: #{poly_model_forward.1} parent=1 // pred_check
      _
    $region7: #{poly_model_forward.1} parent=1 // pred_check_branch
      %22 = sbr.rel (0) target = $region9
    $region8: #{poly_model_forward.1} parent=1 // pred_region
      _
    $region9: #{poly_model_forward.1} parent=1 // pred_fallthru
      _
    // Predicated region
    $region10: #{poly_model_forward.1} parent=1 // pred_check
      _
    $region11: #{poly_model_forward.1} parent=1 // pred_check_branch
      %24 = sbr.rel (0) target = $region13
    $region12: #{poly_model_forward.1} parent=1 // pred_region
      %26 = vsyncadd [#allocation4], 0
      %s28 = sshll.u32 %s2, 4
      %s29 = int_to_ptr.hbm [resolvable:$true] %s28
      %s30 = sshll.u32 [#allocation7], 4
      %s31 = int_to_ptr.vmem [resolvable:$true] %s30
      %33 = dma.hbm_to_vmem [thread:$0]  %s29, 64, %s31, [#allocation4]
    $region13: #{poly_model_forward.1} parent=1 // pred_fallthru
      _
    // Predicated region
    $region14: #{poly_model_forward.1} parent=1 // pred_check
      _
    $region15: #{poly_model_forward.1} parent=1 // pred_check_branch
      %35 = sbr.rel (0) target = $region17
    $region16: #{poly_model_forward.1} parent=1 // pred_region
      %37 = dma.done [#allocation6], 16
    $region17: #{poly_model_forward.1} parent=1 // pred_fallthru
      _
    // Predicated region
    $region18: #{poly_model_forward.1} parent=1 // pred_check
      _
    $region19: #{poly_model_forward.1} parent=1 // pred_check_branch
      %39 = sbr.rel (0) target = $region21
    $region20: #{poly_model_forward.1} parent=1 // pred_region
      %41 = dma.done [#allocation4], 64
    $region21: #{poly_model_forward.1} parent=1 // pred_fallthru
      _
    %42 = sfence
    %s43 = sld [smem:[#allocation3]]
    %s44 = sld [smem:[#allocation3 + $0x1]]
    %s45 = sld [smem:[#allocation3 + $0x2]]
    %s46 = sld [smem:[#allocation2]]
    %v47 = vld [vmem:[#allocation7] sm:$0x1]
    %v48 = vstv %s43
    %v49 = vmul.f32 %v47, %v48
    %v50 = vld [vmem:[#allocation7 + $0x1] sm:$0x1]
    %v51 = vstv %s44
    %v52 = vmul.f32 %v50, %v51
    %v53 = vadd.f32 %v49, %v52
    %v54 = vld [vmem:[#allocation7 + $0x2] sm:$0x1]
    %v55 = vstv %s45
    %v56 = vmul.f32 %v54, %v55
    %v57 = vadd.f32 %v53, %v56
    %v58 = vstv %s46
    %v59 = vadd.f32 %v57, %v58
    %60 = vst [vmem:[#allocation8] sm:$0x1] %v59
    // Predicated region
    $region22: #{poly_model_forward.1} parent=1 // pred_check
      _
    $region23: #{poly_model_forward.1} parent=1 // pred_check_branch
      %62 = sbr.rel (0) target = $region25
    $region24: #{poly_model_forward.1} parent=1 // pred_region
      %64 = vsyncadd [#allocation5], 0
      %s66 = sshll.u32 [#allocation8], 4
      %s67 = int_to_ptr.vmem [resolvable:$true] %s66
      %s68 = sshll.u32 %s3, 4
      %s69 = int_to_ptr.hbm [resolvable:$true] %s68
      %71 = dma.vmem_to_hbm [thread:$0]  %s67, 16, %s69, [#allocation5]
    $region25: #{poly_model_forward.1} parent=1 // pred_fallthru
      _
    // Predicated region
    $region26: #{poly_model_forward.1} parent=1 // pred_check
      _
    $region27: #{poly_model_forward.1} parent=1 // pred_check_branch
      %73 = sbr.rel (0) target = $region29
    $region28: #{poly_model_forward.1} parent=1 // pred_region
      %75 = dma.done [#allocation5], 16
    $region29: #{poly_model_forward.1} parent=1 // pred_fallthru
      _
    %76 = vsyncpa [#allocation4], 1
    %77 = vsyncpa [#allocation5], 1
    %78 = vsyncpa [#allocation6], 1

</llo_original>
